<compile_context>
chip_gen: v7x
topology: tpu7x:2x2x1
jax: 0.10.0
libtpu: 0.0.40
codegen_flags: <defaults>
</compile_context>

<pallas_src>
import functools

import jax
import jax.numpy as jnp
from jax.experimental import pallas as pl
from jax.experimental.pallas import tpu as pltpu


def _round_up(x, m):
    return (x + m - 1) // m * m


def _base_model_kernel(x_ref, wfe_ref, bfe_ref, w1_ref, b1_ref, w2_ref, b2_ref,
                       o_ref, *, activation):
    # x arrives f32 straight from HBM; cast to bf16 here (cheaper than a
    # separate wrapper-side XLA cast pass).  MXU operands bf16, accumulation
    # f32; bias adds + activation stay f32.
    x_bf = x_ref[...].astype(jnp.bfloat16)

    feat = jnp.dot(x_bf, wfe_ref[...],
                   preferred_element_type=jnp.float32) + bfe_ref[...]

    h = jnp.dot(feat.astype(jnp.bfloat16), w1_ref[...],
                preferred_element_type=jnp.float32) + b1_ref[...]

    if activation == "relu":
        h = jnp.maximum(h, 0.0)
    else:  # sigmoid
        h = jax.nn.sigmoid(h)

    out = jnp.dot(h.astype(jnp.bfloat16), w2_ref[...],
                  preferred_element_type=jnp.float32) + b2_ref[...]
    o_ref[...] = out.astype(o_ref.dtype)   # bf16 writeback (lane-dense)


def base_model_forward(x, params, *, activation="relu", tb=None,
                       target_grid_steps=1):
    """x: [B, D_in] float32.  params: dict of pre-transposed f32 weights/biases.

    target_grid_steps: 1 (default) => single grid step, optimal on v5e/v6e.
    Pass 2 on v7x so the "parallel" batch axis shards across both TensorCores.
    """
    B, D_in = x.shape
    out_dtype = x.dtype
    wfe, bfe = params["wfe"], params["bfe"]          # [D_in, 2H], [1, 2H]
    w1, b1 = params["w1"], params["b1"]              # [2H, D1],  [1, D1]
    w2, b2 = params["w2"], params["b2"]              # [D1, L],   [1, L]
    two_h = wfe.shape[1]
    d1 = w1.shape[1]
    L = w2.shape[1]

    # ---- wrapper-side layout plumbing (no kernel logic change) ------------
    # 1) Batch tile: one big tile by default (kernel is grid-step-overhead
    #    bound); multiple of 256 for the 256-wide MXU on v6e/v7x, multiple of
    #    16 for bf16 sublane packing, capped at 1024 to bound VMEM.
    if tb is None:
        steps = max(int(target_grid_steps), 1)
        tb = min(1024, _round_up(pl.cdiv(max(B, 1), steps), 256))
    tb = max(16, _round_up(tb, 16))
    B_pad = _round_up(max(B, tb), tb)
    if B_pad != B:
        x = jnp.pad(x, ((0, B_pad - B), (0, 0)))
    # 2) Lane-dense output: pad num_labels (and w2/b2) to a multiple of 128 so
    #    the output store is a full, unmasked vst.
    Lp = _round_up(L, 128)
    if Lp != L:
        w2 = jnp.pad(w2, ((0, 0), (0, Lp - L)))
        b2 = jnp.pad(b2, ((0, 0), (0, Lp - L)))
    # 3) bf16 MXU weights; biases stay f32; x stays f32 (cast happens in-kernel).
    wfe_bf = wfe.astype(jnp.bfloat16)
    w1_bf = w1.astype(jnp.bfloat16)
    w2_bf = w2.astype(jnp.bfloat16)

    grid = (B_pad // tb,)
    kernel = functools.partial(_base_model_kernel, activation=activation)

    # Weights / biases are grid-invariant (block index (0,0) every step):
    # keep them resident and single-buffered so they don't double VMEM cost.
    def _resident(shape):
        return pl.BlockSpec(shape, lambda i: (0, 0),
                            pipeline_mode=pl.Buffered(1))

    bf16, f32 = 2, 4
    vmem_est = (
        2 * tb * D_in * f32                               # x tile (double-buffered, f32)
        + 2 * tb * Lp * bf16                              # out tile (double-buffered, bf16)
        + (D_in * two_h + two_h * d1 + d1 * Lp) * bf16    # resident bf16 weights
        + (two_h + d1 + Lp) * f32                         # resident f32 biases
        + tb * (two_h + d1 + Lp) * f32                    # f32 intermediates
    )
    # Never request all of v7x's 64 MiB physical VMEM; cap at 48 MiB.
    vmem_limit = int(min(max(2 * vmem_est, 16 << 20), 48 << 20))

    flops = 2 * B_pad * (D_in * two_h + two_h * d1 + d1 * Lp)
    transcendentals = 0 if activation == "relu" else B_pad * d1
    bytes_accessed = (
        B_pad * D_in * f32 + B_pad * Lp * bf16
        + (D_in * two_h + two_h * d1 + d1 * Lp) * bf16
        + (two_h + d1 + Lp) * f32
    )

    out = pl.pallas_call(
        kernel,
        out_shape=jax.ShapeDtypeStruct((B_pad, Lp), jnp.bfloat16),
        grid_spec=pl.GridSpec(
            grid=grid,
            in_specs=[
                pl.BlockSpec((tb, D_in), lambda i: (i, 0)),   # x (batch-tiled, f32)
                _resident((D_in, two_h)),                     # wfe
                _resident((1, two_h)),                        # bfe
                _resident((two_h, d1)),                       # w1
                _resident((1, d1)),                           # b1
                _resident((d1, Lp)),                          # w2 (lane-padded)
                _resident((1, Lp)),                           # b2 (lane-padded)
            ],
            out_specs=pl.BlockSpec((tb, Lp), lambda i: (i, 0)),
        ),
        compiler_params=pltpu.CompilerParams(
            dimension_semantics=("parallel",),   # megacore split over batch tiles (v7x)
            vmem_limit_bytes=vmem_limit,
        ),
        cost_estimate=pl.CostEstimate(
            flops=flops,
            transcendentals=transcendentals,
            bytes_accessed=bytes_accessed),
    )(x, wfe_bf, bfe, w1_bf, b1, w2_bf, b2)

    # TODO(synk): if D_in*2H at bf16 ever approaches the v7x 64 MiB VMEM budget
    # (huge feature extractor), add a K-reduction grid axis over the first
    # matmul with a pl.when-initialized f32 accumulator instead of holding wfe
    # fully resident.
    return out[:B, :L].astype(out_dtype)


def init_params(key, d_in, hidden_size, dense1_out_size, num_labels):
    """Deterministic synthetic parameter init (PyTorch-Linear-style uniform)."""
    two_h = hidden_size * 2
    ks = jax.random.split(key, 6)

    def uni(k, shape, fan_in):
        bound = 1.0 / jnp.sqrt(fan_in)
        return jax.random.uniform(k, shape, jnp.float32, -bound, bound)

    return {
        "wfe": uni(ks[0], (d_in, two_h), d_in),
        "bfe": uni(ks[1], (1, two_h), d_in),
        "w1": uni(ks[2], (two_h, dense1_out_size), two_h),
        "b1": uni(ks[3], (1, dense1_out_size), two_h),
        "w2": uni(ks[4], (dense1_out_size, num_labels), dense1_out_size),
        "b2": uni(ks[5], (1, num_labels), dense1_out_size),
    }


def reference_forward(x, params, activation="relu"):
    feat = x @ params["wfe"] + params["bfe"]
    h = feat @ params["w1"] + params["b1"]
    h = jnp.maximum(h, 0.0) if activation == "relu" else jax.nn.sigmoid(h)
    return h @ params["w2"] + params["b2"]


if __name__ == "__main__":
    key = jax.random.PRNGKey(0)
    k_x, k_p = jax.random.split(key)

    # Small shapes consistent with the module.  B=200 is deliberately not a
    # multiple of the batch tile so the pad-and-slice batch path is exercised.
    B, D_in = 200, 32
    hidden_size, dense1_out_size, num_labels = 16, 32, 4

    x = jax.random.normal(k_x, (B, D_in), jnp.float32)
    params = init_params(k_p, D_in, hidden_size, dense1_out_size, num_labels)

    for act in ("relu", "sigmoid"):
        out = base_model_forward(x, params, activation=act)
        out = jax.block_until_ready(out)
        ref = reference_forward(x, params, activation=act)
        assert out.shape == (B, num_labels)
        assert out.dtype == x.dtype
        # bf16 MXU operands / bf16 writeback with f32 accumulation vs. pure-f32
        # reference.
        assert jnp.allclose(out, ref, atol=5e-2, rtol=5e-2), (
            act, float(jnp.max(jnp.abs(out - ref))))

    print("KERNEL_OK")
</pallas_src>

<mosaic_0001>
module attributes {stable_mosaic.version = 11 : i64} {
  func.func @_base_model_kernel(%arg0: i32, %arg1: memref<256x32xf32, #tpu.memory_space<vmem>>, %arg2: memref<32x32xbf16, #tpu.memory_space<vmem>>, %arg3: memref<1x32xf32, #tpu.memory_space<vmem>>, %arg4: memref<32x32xbf16, #tpu.memory_space<vmem>>, %arg5: memref<1x32xf32, #tpu.memory_space<vmem>>, %arg6: memref<32x128xbf16, #tpu.memory_space<vmem>>, %arg7: memref<1x128xf32, #tpu.memory_space<vmem>>, %arg8: memref<256x128xbf16, #tpu.memory_space<vmem>>) attributes {dimension_semantics = [#tpu.dimension_semantics<parallel>], iteration_bounds = array<i64: 1>, scalar_prefetch = 0 : i64, scratch_operands = 0 : i64, tpu.core_type = #tpu.core_type<tc>, window_params = [{transform_indices = @transform_0, window_bounds = array<i64: 256, 32>}, {pipeline_mode = #tpu.pipeline_mode<synchronous>, transform_indices = @transform_1, window_bounds = array<i64: 32, 32>}, {pipeline_mode = #tpu.pipeline_mode<synchronous>, transform_indices = @transform_2, window_bounds = array<i64: 1, 32>}, {pipeline_mode = #tpu.pipeline_mode<synchronous>, transform_indices = @transform_3, window_bounds = array<i64: 32, 32>}, {pipeline_mode = #tpu.pipeline_mode<synchronous>, transform_indices = @transform_4, window_bounds = array<i64: 1, 32>}, {pipeline_mode = #tpu.pipeline_mode<synchronous>, transform_indices = @transform_5, window_bounds = array<i64: 32, 128>}, {pipeline_mode = #tpu.pipeline_mode<synchronous>, transform_indices = @transform_6, window_bounds = array<i64: 1, 128>}, {transform_indices = @transform_7, window_bounds = array<i64: 256, 128>}]} {
    %c0 = arith.constant 0 : index
    %c0_0 = arith.constant 0 : index
    %0 = vector.load %arg1[%c0, %c0_0] : memref<256x32xf32, #tpu.memory_space<vmem>>, vector<256x32xf32>
    %1 = arith.truncf %0 : vector<256x32xf32> to vector<256x32xbf16>
    %c0_1 = arith.constant 0 : index
    %c0_2 = arith.constant 0 : index
    %2 = vector.load %arg2[%c0_1, %c0_2] : memref<32x32xbf16, #tpu.memory_space<vmem>>, vector<32x32xbf16>
    %cst = arith.constant dense<0.000000e+00> : vector<256x32xf32>
    %3 = tpu.matmul %1, %2, %cst {dimension_numbers = #tpu.dot_dimension_numbers<[1], [0], [0], [1], [0, 0, 1, 1], [], []>} : vector<256x32xbf16>, vector<32x32xbf16>, vector<256x32xf32> -> vector<256x32xf32>
    %c0_3 = arith.constant 0 : index
    %c0_4 = arith.constant 0 : index
    %4 = vector.load %arg3[%c0_3, %c0_4] : memref<1x32xf32, #tpu.memory_space<vmem>>, vector<1x32xf32>
    %5 = vector.broadcast %4 : vector<1x32xf32> to vector<256x32xf32>
    %6 = arith.addf %3, %5 : vector<256x32xf32>
    %7 = arith.truncf %6 : vector<256x32xf32> to vector<256x32xbf16>
    %c0_5 = arith.constant 0 : index
    %c0_6 = arith.constant 0 : index
    %8 = vector.load %arg4[%c0_5, %c0_6] : memref<32x32xbf16, #tpu.memory_space<vmem>>, vector<32x32xbf16>
    %cst_7 = arith.constant dense<0.000000e+00> : vector<256x32xf32>
    %9 = tpu.matmul %7, %8, %cst_7 {dimension_numbers = #tpu.dot_dimension_numbers<[1], [0], [0], [1], [0, 0, 1, 1], [], []>} : vector<256x32xbf16>, vector<32x32xbf16>, vector<256x32xf32> -> vector<256x32xf32>
    %c0_8 = arith.constant 0 : index
    %c0_9 = arith.constant 0 : index
    %10 = vector.load %arg5[%c0_8, %c0_9] : memref<1x32xf32, #tpu.memory_space<vmem>>, vector<1x32xf32>
    %11 = vector.broadcast %10 : vector<1x32xf32> to vector<256x32xf32>
    %12 = arith.addf %9, %11 : vector<256x32xf32>
    %cst_10 = arith.constant 0.000000e+00 : f32
    %13 = vector.broadcast %cst_10 : f32 to vector<256x32xf32>
    %14 = arith.maximumf %12, %13 : vector<256x32xf32>
    %15 = arith.truncf %14 : vector<256x32xf32> to vector<256x32xbf16>
    %c0_11 = arith.constant 0 : index
    %c0_12 = arith.constant 0 : index
    %16 = vector.load %arg6[%c0_11, %c0_12] : memref<32x128xbf16, #tpu.memory_space<vmem>>, vector<32x128xbf16>
    %cst_13 = arith.constant dense<0.000000e+00> : vector<256x128xf32>
    %17 = tpu.matmul %15, %16, %cst_13 {dimension_numbers = #tpu.dot_dimension_numbers<[1], [0], [0], [1], [0, 0, 1, 1], [], []>} : vector<256x32xbf16>, vector<32x128xbf16>, vector<256x128xf32> -> vector<256x128xf32>
    %c0_14 = arith.constant 0 : index
    %c0_15 = arith.constant 0 : index
    %18 = vector.load %arg7[%c0_14, %c0_15] : memref<1x128xf32, #tpu.memory_space<vmem>>, vector<1x128xf32>
    %19 = vector.broadcast %18 : vector<1x128xf32> to vector<256x128xf32>
    %20 = arith.addf %17, %19 : vector<256x128xf32>
    %21 = arith.truncf %20 : vector<256x128xf32> to vector<256x128xbf16>
    %c0_16 = arith.constant 0 : index
    %c0_17 = arith.constant 0 : index
    %22 = vector.load %arg8[%c0_16, %c0_17] : memref<256x128xbf16, #tpu.memory_space<vmem>>, vector<256x128xbf16>
    tpu.vector_store %arg8[%c0_16, %c0_17], %21 {strides = array<i32>} : memref<256x128xbf16, #tpu.memory_space<vmem>>, vector<256x128xbf16>,
    return
  }
  func.func @transform_0(%arg0: i32) -> (i32, i32) {
    %c0_i32 = arith.constant 0 : i32
    %c0_i32_0 = arith.constant 0 : i32
    return %arg0, %c0_i32 : i32, i32
  }
  func.func @transform_1(%arg0: i32) -> (i32, i32) {
    %c0_i32 = arith.constant 0 : i32
    %c0_i32_0 = arith.constant 0 : i32
    %c0_i32_1 = arith.constant 0 : i32
    return %c0_i32, %c0_i32_0 : i32, i32
  }
  func.func @transform_2(%arg0: i32) -> (i32, i32) {
    %c0_i32 = arith.constant 0 : i32
    %c0_i32_0 = arith.constant 0 : i32
    %c0_i32_1 = arith.constant 0 : i32
    return %c0_i32, %c0_i32_0 : i32, i32
  }
  func.func @transform_3(%arg0: i32) -> (i32, i32) {
    %c0_i32 = arith.constant 0 : i32
    %c0_i32_0 = arith.constant 0 : i32
    %c0_i32_1 = arith.constant 0 : i32
    return %c0_i32, %c0_i32_0 : i32, i32
  }
  func.func @transform_4(%arg0: i32) -> (i32, i32) {
    %c0_i32 = arith.constant 0 : i32
    %c0_i32_0 = arith.constant 0 : i32
    %c0_i32_1 = arith.constant 0 : i32
    return %c0_i32, %c0_i32_0 : i32, i32
  }
  func.func @transform_5(%arg0: i32) -> (i32, i32) {
    %c0_i32 = arith.constant 0 : i32
    %c0_i32_0 = arith.constant 0 : i32
    %c0_i32_1 = arith.constant 0 : i32
    return %c0_i32, %c0_i32_0 : i32, i32
  }
  func.func @transform_6(%arg0: i32) -> (i32, i32) {
    %c0_i32 = arith.constant 0 : i32
    %c0_i32_0 = arith.constant 0 : i32
    %c0_i32_1 = arith.constant 0 : i32
    return %c0_i32, %c0_i32_0 : i32, i32
  }
  func.func @transform_7(%arg0: i32) -> (i32, i32) {
    %c0_i32 = arith.constant 0 : i32
    %c0_i32_0 = arith.constant 0 : i32
    return %arg0, %c0_i32 : i32, i32
  }
}

</mosaic_0001>

<llo_original>
// kernel: tpu_custom_call.1
$region0: #{tpu_custom_call.1}
  #allocation0 [shape = 'u32[]', space=smem, size = 0x4, offset = 0x4, fixed_abs, tag = 'smem constant byte address 0x4 - core index']
  #allocation1 [shape = 'u32[144,128]{1,0:T(1,128)}', space=vmem, size = 0x12000, scoped, tag = 'internal scratch']
  %s0 = inlined_call_operand.vmem [shape: f32[256,32], index: 0, kind: input, shape index: {}]
  %s1 = inlined_call_operand.vmem [shape: bf16[32,32], index: 1, kind: input, shape index: {}]
  %s2 = inlined_call_operand.vmem [shape: f32[1,32], index: 2, kind: input, shape index: {}]
  %s3 = inlined_call_operand.vmem [shape: bf16[32,32], index: 3, kind: input, shape index: {}]
  %s4 = inlined_call_operand.vmem [shape: f32[1,32], index: 4, kind: input, shape index: {}]
  %s5 = inlined_call_operand.vmem [shape: bf16[32,128], index: 5, kind: input, shape index: {}]
  %s6 = inlined_call_operand.vmem [shape: f32[1,128], index: 6, kind: input, shape index: {}]
  %s7 = inlined_call_operand.hbm [shape: bf16[256,128], index: 7, kind: output, shape index: {}]
  %s8 = sld [smem:[#allocation0]]
  $region38: #{tpu_custom_call.1} parent=0
    _
  %s10 = ssub.s32 1, %s8
  %s11 = scalar_select 0, %s10, %s8
  $region1: #{tpu_custom_call.1} parent=0
    #allocation2 [shape = 'u8[65536]{0}', space=vmem, size = 0x10000, scoped, tag = 'output window, operand 0, single buffered']
    #allocation3 [shape = 's32[1]{0}', space=sflag, size = 0x4, scoped, tag = 'scoped memory for tpu_custom_call.1']
    %12 = vsyncpa [#allocation3], 0
    // Predicated region
    $region2: #{tpu_custom_call.1} parent=1 // pred_check
      _
    $region3: #{tpu_custom_call.1} parent=1 // pred_check_branch
      %14 = sbr.rel (0) target = $region5
    $region4: #{tpu_custom_call.1} parent=1 // pred_region
      _
    $region5: #{tpu_custom_call.1} parent=1 // pred_fallthru
      _
    // Predicated region
    $region6: #{tpu_custom_call.1} parent=1 // pred_check
      _
    $region7: #{tpu_custom_call.1} parent=1 // pred_check_branch
      %16 = sbr.rel (0) target = $region9
    $region8: #{tpu_custom_call.1} parent=1 // pred_region
      _
    $region9: #{tpu_custom_call.1} parent=1 // pred_fallthru
      _
    // Predicated region
    $region10: #{tpu_custom_call.1} parent=1 // pred_check
      _
    $region11: #{tpu_custom_call.1} parent=1 // pred_check_branch
      %18 = sbr.rel (0) target = $region13
    $region12: #{tpu_custom_call.1} parent=1 // pred_region
      _
    $region13: #{tpu_custom_call.1} parent=1 // pred_fallthru
      _
    // Predicated region
    $region14: #{tpu_custom_call.1} parent=1 // pred_check
      _
    $region15: #{tpu_custom_call.1} parent=1 // pred_check_branch
      %20 = sbr.rel (0) target = $region17
    $region16: #{tpu_custom_call.1} parent=1 // pred_region
      _
    $region17: #{tpu_custom_call.1} parent=1 // pred_fallthru
      _
    // Predicated region
    $region18: #{tpu_custom_call.1} parent=1 // pred_check
      _
    $region19: #{tpu_custom_call.1} parent=1 // pred_check_branch
      %22 = sbr.rel (0) target = $region21
    $region20: #{tpu_custom_call.1} parent=1 // pred_region
      _
    $region21: #{tpu_custom_call.1} parent=1 // pred_fallthru
      _
    // Predicated region
    $region22: #{tpu_custom_call.1} parent=1 // pred_check
      _
    $region23: #{tpu_custom_call.1} parent=1 // pred_check_branch
      %24 = sbr.rel (0) target = $region25
    $region24: #{tpu_custom_call.1} parent=1 // pred_region
      _
    $region25: #{tpu_custom_call.1} parent=1 // pred_fallthru
      _
    // Predicated region
    $region26: #{tpu_custom_call.1} parent=1 // pred_check
      _
    $region27: #{tpu_custom_call.1} parent=1 // pred_check_branch
      %26 = sbr.rel (0) target = $region29
    $region28: #{tpu_custom_call.1} parent=1 // pred_region
      _
    $region29: #{tpu_custom_call.1} parent=1 // pred_fallthru
      _
    %v28 = vld [vmem:[%s0] sm:$0xff]
    %v29 = vld [vmem:[%s0 + $0x8] sm:$0xff]
    %v30 = vld [vmem:[%s0 + $0x10] sm:$0xff]
    %v31 = vld [vmem:[%s0 + $0x18] sm:$0xff]
    %v32 = vld [vmem:[%s0 + $0x20] sm:$0xff]
    %v33 = vld [vmem:[%s0 + $0x28] sm:$0xff]
    %v34 = vld [vmem:[%s0 + $0x30] sm:$0xff]
    %v35 = vld [vmem:[%s0 + $0x38] sm:$0xff]
    %v36 = vld [vmem:[%s0 + $0x40] sm:$0xff]
    %v37 = vld [vmem:[%s0 + $0x48] sm:$0xff]
    %v38 = vld [vmem:[%s0 + $0x50] sm:$0xff]
    %v39 = vld [vmem:[%s0 + $0x58] sm:$0xff]
    %v40 = vld [vmem:[%s0 + $0x60] sm:$0xff]
    %v41 = vld [vmem:[%s0 + $0x68] sm:$0xff]
    %v42 = vld [vmem:[%s0 + $0x70] sm:$0xff]
    %v43 = vld [vmem:[%s0 + $0x78] sm:$0xff]
    %v44 = vld [vmem:[%s0 + $0x80] sm:$0xff]
    %v45 = vld [vmem:[%s0 + $0x88] sm:$0xff]
    %v46 = vld [vmem:[%s0 + $0x90] sm:$0xff]
    %v47 = vld [vmem:[%s0 + $0x98] sm:$0xff]
    %v48 = vld [vmem:[%s0 + $0xa0] sm:$0xff]
    %v49 = vld [vmem:[%s0 + $0xa8] sm:$0xff]
    %v50 = vld [vmem:[%s0 + $0xb0] sm:$0xff]
    %v51 = vld [vmem:[%s0 + $0xb8] sm:$0xff]
    %v52 = vld [vmem:[%s0 + $0xc0] sm:$0xff]
    %v53 = vld [vmem:[%s0 + $0xc8] sm:$0xff]
    %v54 = vld [vmem:[%s0 + $0xd0] sm:$0xff]
    %v55 = vld [vmem:[%s0 + $0xd8] sm:$0xff]
    %v56 = vld [vmem:[%s0 + $0xe0] sm:$0xff]
    %v57 = vld [vmem:[%s0 + $0xe8] sm:$0xff]
    %v58 = vld [vmem:[%s0 + $0xf0] sm:$0xff]
    %v59 = vld [vmem:[%s0 + $0xf8] sm:$0xff]
    %v60 = vpack.c.bf16 %v29, %v28
    %v61 = vpack.c.bf16 %v31, %v30
    %v62 = vpack.c.bf16 %v33, %v32
    %v63 = vpack.c.bf16 %v35, %v34
    %v64 = vpack.c.bf16 %v37, %v36
    %v65 = vpack.c.bf16 %v39, %v38
    %v66 = vpack.c.bf16 %v41, %v40
    %v67 = vpack.c.bf16 %v43, %v42
    %v68 = vpack.c.bf16 %v45, %v44
    %v69 = vpack.c.bf16 %v47, %v46
    %v70 = vpack.c.bf16 %v49, %v48
    %v71 = vpack.c.bf16 %v51, %v50
    %v72 = vpack.c.bf16 %v53, %v52
    %v73 = vpack.c.bf16 %v55, %v54
    %v74 = vpack.c.bf16 %v57, %v56
    %v75 = vpack.c.bf16 %v59, %v58
    %v76 = vld [vmem:[%s1] sm:$0xf]
    %v77 = vld [vmem:[%s1 + $0x4] sm:$0xf]
    %v78 = vld [vmem:[%s1 + $0x8] sm:$0xf]
    %v79 = vld [vmem:[%s1 + $0xc] sm:$0xf]
    %v80 = vld [vmem:[%s2] sm:$0x1]
    %v82 = vlaneseq
    %v83 = vshrl.u32 %v82, 7
    %v84 = vsub.s32 0, %v83
    %v85 = vrot.slane %v80, %v84
    %v91 = vunpack.c.l.b16 %v76
    %v92 = vunpack.c.l.b16 %v77
    %v93 = vunpack.c.l.b16 %v78
    %v94 = vunpack.c.l.b16 %v79
    %v95 = vpack.c.b16 %v92, %v91
    %v96 = vpack.c.b16 %v94, %v93
    %vm99 = vcmask 261120
    %v101 = vsel %vm99, %v60, 0
    %v104 = vsel %vm99, %v61, 0
    %v107 = vsel %vm99, %v62, 0
    %v110 = vsel %vm99, %v63, 0
    %v113 = vsel %vm99, %v64, 0
    %v116 = vsel %vm99, %v65, 0
    %v119 = vsel %vm99, %v66, 0
    %v122 = vsel %vm99, %v67, 0
    %v125 = vsel %vm99, %v68, 0
    %v128 = vsel %vm99, %v69, 0
    %v131 = vsel %vm99, %v70, 0
    %v134 = vsel %vm99, %v71, 0
    %v137 = vsel %vm99, %v72, 0
    %v140 = vsel %vm99, %v73, 0
    %v143 = vsel %vm99, %v74, 0
    %v146 = vsel %vm99, %v75, 0
    %148 = vmatprep.subr.bf16.mxu0 0
    %149 = vmatpush1.bf16.msra.mxu0 %v95
    %150 = vmatprep.subr.bf16.mxu0 0
    %151 = vmatpush1.bf16.msra.mxu0 %v96
    %152 = vmatprep.subr.bf16.mxu0 0
    %153 = vmatpush1.bf16.msra.mxu0 0
    %154 = vmatprep.subr.bf16.mxu0 0
    %155 = vmatpush1.bf16.msra.mxu0 0
    %156 = vmatprep.subr.bf16.mxu0 0
    %157 = vmatpush1.bf16.msra.mxu0 0
    %158 = vmatprep.subr.bf16.mxu0 0
    %159 = vmatpush1.bf16.msra.mxu0 0
    %160 = vmatprep.subr.bf16.mxu0 0
    %161 = vmatpush1.bf16.msra.mxu0 0
    %162 = vmatprep.subr.bf16.mxu0 0
    %163 = vmatpush1.bf16.msra.mxu0 0
    %164 = vmatprep.subr.bf16.mxu0 0
    %165 = vmatpush1.bf16.msra.mxu0 0
    %166 = vmatprep.subr.bf16.mxu0 0
    %167 = vmatpush1.bf16.msra.mxu0 0
    %168 = vmatprep.subr.bf16.mxu0 0
    %169 = vmatpush1.bf16.msra.mxu0 0
    %170 = vmatprep.subr.bf16.mxu0 0
    %171 = vmatpush1.bf16.msra.mxu0 0
    %172 = vmatprep.subr.bf16.mxu0 0
    %173 = vmatpush1.bf16.msra.mxu0 0
    %174 = vmatprep.subr.bf16.mxu0 0
    %175 = vmatpush1.bf16.msra.mxu0 0
    %176 = vmatprep.subr.bf16.mxu0 0
    %177 = vmatpush1.bf16.msra.mxu0 0
    %178 = vmatprep.subr.bf16.mxu0 0
    %179 = vmatpush1.bf16.msra.mxu0 0
    %180 = vmatprep.mubr.bf16.mxu0 0
    %181 = vmatmul.mubr.bf16.gmra.mrb[0].mxu0 %v101
    %v182 = vpop.f32.mrb[0].mxu0
    %v183 = vadd.f32 %v85, %v182
    %v184 = vpop.f32.mrb[0].mxu0
    %v185 = vpop.f32.mrb[0].mxu0
    %v186 = vadd.f32 %v85, %v185
    %v187 = vpop.f32.mrb[0].mxu0
    %188 = vmatprep.mubr.bf16.mxu0 0
    %189 = vmatmul.mubr.bf16.gmra.mrb[0].mxu0 %v104
    %v190 = vpop.f32.mrb[0].mxu0
    %v191 = vadd.f32 %v85, %v190
    %v192 = vpop.f32.mrb[0].mxu0
    %v193 = vpop.f32.mrb[0].mxu0
    %v194 = vadd.f32 %v85, %v193
    %v195 = vpop.f32.mrb[0].mxu0
    %196 = vmatprep.mubr.bf16.mxu0 0
    %197 = vmatmul.mubr.bf16.gmra.mrb[0].mxu0 %v107
    %v198 = vpop.f32.mrb[0].mxu0
    %v199 = vadd.f32 %v85, %v198
    %v200 = vpop.f32.mrb[0].mxu0
    %v201 = vpop.f32.mrb[0].mxu0
    %v202 = vadd.f32 %v85, %v201
    %v203 = vpop.f32.mrb[0].mxu0
    %204 = vmatprep.mubr.bf16.mxu0 0
    %205 = vmatmul.mubr.bf16.gmra.mrb[0].mxu0 %v110
    %v206 = vpop.f32.mrb[0].mxu0
    %v207 = vadd.f32 %v85, %v206
    %v208 = vpop.f32.mrb[0].mxu0
    %v209 = vpop.f32.mrb[0].mxu0
    %v210 = vadd.f32 %v85, %v209
    %v211 = vpop.f32.mrb[0].mxu0
    %212 = vmatprep.mubr.bf16.mxu0 0
    %213 = vmatmul.mubr.bf16.gmra.mrb[0].mxu0 %v113
    %v214 = vpop.f32.mrb[0].mxu0
    %v215 = vadd.f32 %v85, %v214
    %v216 = vpop.f32.mrb[0].mxu0
    %v217 = vpop.f32.mrb[0].mxu0
    %v218 = vadd.f32 %v85, %v217
    %v219 = vpop.f32.mrb[0].mxu0
    %220 = vmatprep.mubr.bf16.mxu0 0
    %221 = vmatmul.mubr.bf16.gmra.mrb[0].mxu0 %v116
    %v222 = vpop.f32.mrb[0].mxu0
    %v223 = vadd.f32 %v85, %v222
    %v224 = vpop.f32.mrb[0].mxu0
    %v225 = vpop.f32.mrb[0].mxu0
    %v226 = vadd.f32 %v85, %v225
    %v227 = vpop.f32.mrb[0].mxu0
    %228 = vmatprep.mubr.bf16.mxu0 0
    %229 = vmatmul.mubr.bf16.gmra.mrb[0].mxu0 %v119
    %v230 = vpop.f32.mrb[0].mxu0
    %v231 = vadd.f32 %v85, %v230
    %v232 = vpop.f32.mrb[0].mxu0
    %v233 = vpop.f32.mrb[0].mxu0
    %v234 = vadd.f32 %v85, %v233
    %v235 = vpop.f32.mrb[0].mxu0
    %236 = vmatprep.mubr.bf16.mxu0 0
    %237 = vmatmul.mubr.bf16.gmra.mrb[0].mxu0 %v122
    %v238 = vpop.f32.mrb[0].mxu0
    %v239 = vadd.f32 %v85, %v238
    %v240 = vpop.f32.mrb[0].mxu0
    %v241 = vpop.f32.mrb[0].mxu0
    %v242 = vadd.f32 %v85, %v241
    %v243 = vpop.f32.mrb[0].mxu0
    %244 = vmatprep.mubr.bf16.mxu0 0
    %245 = vmatmul.mubr.bf16.gmra.mrb[0].mxu0 %v125
    %v246 = vpop.f32.mrb[0].mxu0
    %v247 = vadd.f32 %v85, %v246
    %v248 = vpop.f32.mrb[0].mxu0
    %v249 = vpop.f32.mrb[0].mxu0
    %v250 = vadd.f32 %v85, %v249
    %v251 = vpop.f32.mrb[0].mxu0
    %252 = vmatprep.mubr.bf16.mxu0 0
    %253 = vmatmul.mubr.bf16.gmra.mrb[0].mxu0 %v128
    %v254 = vpop.f32.mrb[0].mxu0
    %v255 = vadd.f32 %v85, %v254
    %v256 = vpop.f32.mrb[0].mxu0
    %v257 = vpop.f32.mrb[0].mxu0
    %v258 = vadd.f32 %v85, %v257
    %v259 = vpop.f32.mrb[0].mxu0
    %260 = vmatprep.mubr.bf16.mxu0 0
    %261 = vmatmul.mubr.bf16.gmra.mrb[0].mxu0 %v131
    %v262 = vpop.f32.mrb[0].mxu0
    %v263 = vadd.f32 %v85, %v262
    %v264 = vpop.f32.mrb[0].mxu0
    %v265 = vpop.f32.mrb[0].mxu0
    %v266 = vadd.f32 %v85, %v265
    %v267 = vpop.f32.mrb[0].mxu0
    %268 = vmatprep.mubr.bf16.mxu0 0
    %269 = vmatmul.mubr.bf16.gmra.mrb[0].mxu0 %v134
    %v270 = vpop.f32.mrb[0].mxu0
    %v271 = vadd.f32 %v85, %v270
    %v272 = vpop.f32.mrb[0].mxu0
    %v273 = vpop.f32.mrb[0].mxu0
    %v274 = vadd.f32 %v85, %v273
    %v275 = vpop.f32.mrb[0].mxu0
    %276 = vmatprep.mubr.bf16.mxu0 0
    %277 = vmatmul.mubr.bf16.gmra.mrb[0].mxu0 %v137
    %v278 = vpop.f32.mrb[0].mxu0
    %v279 = vadd.f32 %v85, %v278
    %v280 = vpop.f32.mrb[0].mxu0
    %v281 = vpop.f32.mrb[0].mxu0
    %v282 = vadd.f32 %v85, %v281
    %v283 = vpop.f32.mrb[0].mxu0
    %284 = vmatprep.mubr.bf16.mxu0 0
    %285 = vmatmul.mubr.bf16.gmra.mrb[0].mxu0 %v140
    %v286 = vpop.f32.mrb[0].mxu0
    %v287 = vadd.f32 %v85, %v286
    %v288 = vpop.f32.mrb[0].mxu0
    %v289 = vpop.f32.mrb[0].mxu0
    %v290 = vadd.f32 %v85, %v289
    %v291 = vpop.f32.mrb[0].mxu0
    %292 = vmatprep.mubr.bf16.mxu0 0
    %293 = vmatmul.mubr.bf16.gmra.mrb[0].mxu0 %v143
    %v294 = vpop.f32.mrb[0].mxu0
    %v295 = vadd.f32 %v85, %v294
    %v296 = vpop.f32.mrb[0].mxu0
    %v297 = vpop.f32.mrb[0].mxu0
    %v298 = vadd.f32 %v85, %v297
    %v299 = vpop.f32.mrb[0].mxu0
    %300 = vmatprep.mubr.bf16.mxu0 0
    %301 = vmatmul.mubr.bf16.gmra.mrb[0].mxu0 %v146
    %v302 = vpop.f32.mrb[0].mxu0
    %v303 = vadd.f32 %v85, %v302
    %v304 = vpop.f32.mrb[0].mxu0
    %v305 = vpop.f32.mrb[0].mxu0
    %v306 = vadd.f32 %v85, %v305
    %v307 = vpop.f32.mrb[0].mxu0
    %308 = vdwg.mxu0
    %v309 = vpack.c.bf16 %v186, %v183
    %v310 = vpack.c.bf16 %v194, %v191
    %v311 = vpack.c.bf16 %v202, %v199
    %v312 = vpack.c.bf16 %v210, %v207
    %v313 = vpack.c.bf16 %v218, %v215
    %v314 = vpack.c.bf16 %v226, %v223
    %v315 = vpack.c.bf16 %v234, %v231
    %v316 = vpack.c.bf16 %v242, %v239
    %v317 = vpack.c.bf16 %v250, %v247
    %v318 = vpack.c.bf16 %v258, %v255
    %v319 = vpack.c.bf16 %v266, %v263
    %v320 = vpack.c.bf16 %v274, %v271
    %v321 = vpack.c.bf16 %v282, %v279
    %v322 = vpack.c.bf16 %v290, %v287
    %v323 = vpack.c.bf16 %v298, %v295
    %v324 = vpack.c.bf16 %v306, %v303
    %v325 = vld [vmem:[%s3] sm:$0xf]
    %v326 = vld [vmem:[%s3 + $0x4] sm:$0xf]
    %v327 = vld [vmem:[%s3 + $0x8] sm:$0xf]
    %v328 = vld [vmem:[%s3 + $0xc] sm:$0xf]
    %v329 = vld [vmem:[%s4] sm:$0x1]
    %v331 = vlaneseq
    %v332 = vshrl.u32 %v331, 7
    %v333 = vsub.s32 0, %v332
    %v334 = vrot.slane %v329, %v333
    %v340 = vunpack.c.l.b16 %v325
    %v341 = vunpack.c.l.b16 %v326
    %v342 = vunpack.c.l.b16 %v327
    %v343 = vunpack.c.l.b16 %v328
    %v344 = vpack.c.b16 %v341, %v340
    %v345 = vpack.c.b16 %v343, %v342
    %v349 = vsel %vm99, %v309, 0
    %v352 = vsel %vm99, %v310, 0
    %v355 = vsel %vm99, %v311, 0
    %v358 = vsel %vm99, %v312, 0
    %v361 = vsel %vm99, %v313, 0
    %v364 = vsel %vm99, %v314, 0
    %v367 = vsel %vm99, %v315, 0
    %v370 = vsel %vm99, %v316, 0
    %v373 = vsel %vm99, %v317, 0
    %v376 = vsel %vm99, %v318, 0
    %v379 = vsel %vm99, %v319, 0
    %v382 = vsel %vm99, %v320, 0
    %v385 = vsel %vm99, %v321, 0
    %v388 = vsel %vm99, %v322, 0
    %v391 = vsel %vm99, %v323, 0
    %v394 = vsel %vm99, %v324, 0
    %396 = vmatprep.subr.bf16.mxu0 0
    %397 = vmatpush1.bf16.msra.mxu0 %v344
    %398 = vmatprep.subr.bf16.mxu0 0
    %399 = vmatpush1.bf16.msra.mxu0 %v345
    %400 = vmatprep.subr.bf16.mxu0 0
    %401 = vmatpush1.bf16.msra.mxu0 0
    %402 = vmatprep.subr.bf16.mxu0 0
    %403 = vmatpush1.bf16.msra.mxu0 0
    %404 = vmatprep.subr.bf16.mxu0 0
    %405 = vmatpush1.bf16.msra.mxu0 0
    %406 = vmatprep.subr.bf16.mxu0 0
    %407 = vmatpush1.bf16.msra.mxu0 0
    %408 = vmatprep.subr.bf16.mxu0 0
    %409 = vmatpush1.bf16.msra.mxu0 0
    %410 = vmatprep.subr.bf16.mxu0 0
    %411 = vmatpush1.bf16.msra.mxu0 0
    %412 = vmatprep.subr.bf16.mxu0 0
    %413 = vmatpush1.bf16.msra.mxu0 0
    %414 = vmatprep.subr.bf16.mxu0 0
    %415 = vmatpush1.bf16.msra.mxu0 0
    %416 = vmatprep.subr.bf16.mxu0 0
    %417 = vmatpush1.bf16.msra.mxu0 0
    %418 = vmatprep.subr.bf16.mxu0 0
    %419 = vmatpush1.bf16.msra.mxu0 0
    %420 = vmatprep.subr.bf16.mxu0 0
    %421 = vmatpush1.bf16.msra.mxu0 0
    %422 = vmatprep.subr.bf16.mxu0 0
    %423 = vmatpush1.bf16.msra.mxu0 0
    %424 = vmatprep.subr.bf16.mxu0 0
    %425 = vmatpush1.bf16.msra.mxu0 0
    %426 = vmatprep.subr.bf16.mxu0 0
    %427 = vmatpush1.bf16.msra.mxu0 0
    %428 = vmatprep.mubr.bf16.mxu0 0
    %429 = vmatmul.mubr.bf16.gmra.mrb[0].mxu0 %v349
    %v430 = vpop.f32.mrb[0].mxu0
    %v431 = vadd.f32 %v334, %v430
    %v432 = vpop.f32.mrb[0].mxu0
    %v433 = vpop.f32.mrb[0].mxu0
    %v434 = vadd.f32 %v334, %v433
    %v435 = vpop.f32.mrb[0].mxu0
    %436 = vmatprep.mubr.bf16.mxu0 0
    %437 = vmatmul.mubr.bf16.gmra.mrb[0].mxu0 %v352
    %v438 = vpop.f32.mrb[0].mxu0
    %v439 = vadd.f32 %v334, %v438
    %v440 = vpop.f32.mrb[0].mxu0
    %v441 = vpop.f32.mrb[0].mxu0
    %v442 = vadd.f32 %v334, %v441
    %v443 = vpop.f32.mrb[0].mxu0
    %444 = vmatprep.mubr.bf16.mxu0 0
    %445 = vmatmul.mubr.bf16.gmra.mrb[0].mxu0 %v355
    %v446 = vpop.f32.mrb[0].mxu0
    %v447 = vadd.f32 %v334, %v446
    %v448 = vpop.f32.mrb[0].mxu0
    %v449 = vpop.f32.mrb[0].mxu0
    %v450 = vadd.f32 %v334, %v449
    %v451 = vpop.f32.mrb[0].mxu0
    %452 = vmatprep.mubr.bf16.mxu0 0
    %453 = vmatmul.mubr.bf16.gmra.mrb[0].mxu0 %v358
    %v454 = vpop.f32.mrb[0].mxu0
    %v455 = vadd.f32 %v334, %v454
    %v456 = vpop.f32.mrb[0].mxu0
    %v457 = vpop.f32.mrb[0].mxu0
    %v458 = vadd.f32 %v334, %v457
    %v459 = vpop.f32.mrb[0].mxu0
    %460 = vmatprep.mubr.bf16.mxu0 0
    %461 = vmatmul.mubr.bf16.gmra.mrb[0].mxu0 %v361
    %v462 = vpop.f32.mrb[0].mxu0
    %v463 = vadd.f32 %v334, %v462
    %v464 = vpop.f32.mrb[0].mxu0
    %v465 = vpop.f32.mrb[0].mxu0
    %v466 = vadd.f32 %v334, %v465
    %v467 = vpop.f32.mrb[0].mxu0
    %468 = vmatprep.mubr.bf16.mxu0 0
    %469 = vmatmul.mubr.bf16.gmra.mrb[0].mxu0 %v364
    %v470 = vpop.f32.mrb[0].mxu0
    %v471 = vadd.f32 %v334, %v470
    %v472 = vpop.f32.mrb[0].mxu0
    %v473 = vpop.f32.mrb[0].mxu0
    %v474 = vadd.f32 %v334, %v473
    %v475 = vpop.f32.mrb[0].mxu0
    %476 = vmatprep.mubr.bf16.mxu0 0
    %477 = vmatmul.mubr.bf16.gmra.mrb[0].mxu0 %v367
    %v478 = vpop.f32.mrb[0].mxu0
    %v479 = vadd.f32 %v334, %v478
    %v480 = vpop.f32.mrb[0].mxu0
    %v481 = vpop.f32.mrb[0].mxu0
    %v482 = vadd.f32 %v334, %v481
    %v483 = vpop.f32.mrb[0].mxu0
    %484 = vmatprep.mubr.bf16.mxu0 0
    %485 = vmatmul.mubr.bf16.gmra.mrb[0].mxu0 %v370
    %v486 = vpop.f32.mrb[0].mxu0
    %v487 = vadd.f32 %v334, %v486
    %v488 = vpop.f32.mrb[0].mxu0
    %v489 = vpop.f32.mrb[0].mxu0
    %v490 = vadd.f32 %v334, %v489
    %v491 = vpop.f32.mrb[0].mxu0
    %492 = vmatprep.mubr.bf16.mxu0 0
    %493 = vmatmul.mubr.bf16.gmra.mrb[0].mxu0 %v373
    %v494 = vpop.f32.mrb[0].mxu0
    %v495 = vadd.f32 %v334, %v494
    %v496 = vpop.f32.mrb[0].mxu0
    %v497 = vpop.f32.mrb[0].mxu0
    %v498 = vadd.f32 %v334, %v497
    %v499 = vpop.f32.mrb[0].mxu0
    %500 = vmatprep.mubr.bf16.mxu0 0
    %501 = vmatmul.mubr.bf16.gmra.mrb[0].mxu0 %v376
    %v502 = vpop.f32.mrb[0].mxu0
    %v503 = vadd.f32 %v334, %v502
    %v504 = vpop.f32.mrb[0].mxu0
    %v505 = vpop.f32.mrb[0].mxu0
    %v506 = vadd.f32 %v334, %v505
    %v507 = vpop.f32.mrb[0].mxu0
    %508 = vmatprep.mubr.bf16.mxu0 0
    %509 = vmatmul.mubr.bf16.gmra.mrb[0].mxu0 %v379
    %v510 = vpop.f32.mrb[0].mxu0
    %v511 = vadd.f32 %v334, %v510
    %v512 = vpop.f32.mrb[0].mxu0
    %v513 = vpop.f32.mrb[0].mxu0
    %v514 = vadd.f32 %v334, %v513
    %v515 = vpop.f32.mrb[0].mxu0
    %516 = vmatprep.mubr.bf16.mxu0 0
    %517 = vmatmul.mubr.bf16.gmra.mrb[0].mxu0 %v382
    %v518 = vpop.f32.mrb[0].mxu0
    %v519 = vadd.f32 %v334, %v518
    %v520 = vpop.f32.mrb[0].mxu0
    %v521 = vpop.f32.mrb[0].mxu0
    %v522 = vadd.f32 %v334, %v521
    %v523 = vpop.f32.mrb[0].mxu0
    %524 = vmatprep.mubr.bf16.mxu0 0
    %525 = vmatmul.mubr.bf16.gmra.mrb[0].mxu0 %v385
    %v526 = vpop.f32.mrb[0].mxu0
    %v527 = vadd.f32 %v334, %v526
    %v528 = vpop.f32.mrb[0].mxu0
    %v529 = vpop.f32.mrb[0].mxu0
    %v530 = vadd.f32 %v334, %v529
    %v531 = vpop.f32.mrb[0].mxu0
    %532 = vmatprep.mubr.bf16.mxu0 0
    %533 = vmatmul.mubr.bf16.gmra.mrb[0].mxu0 %v388
    %v534 = vpop.f32.mrb[0].mxu0
    %v535 = vadd.f32 %v334, %v534
    %v536 = vpop.f32.mrb[0].mxu0
    %v537 = vpop.f32.mrb[0].mxu0
    %v538 = vadd.f32 %v334, %v537
    %v539 = vpop.f32.mrb[0].mxu0
    %540 = vmatprep.mubr.bf16.mxu0 0
    %541 = vmatmul.mubr.bf16.gmra.mrb[0].mxu0 %v391
    %v542 = vpop.f32.mrb[0].mxu0
    %v543 = vadd.f32 %v334, %v542
    %v544 = vpop.f32.mrb[0].mxu0
    %v545 = vpop.f32.mrb[0].mxu0
    %v546 = vadd.f32 %v334, %v545
    %v547 = vpop.f32.mrb[0].mxu0
    %548 = vmatprep.mubr.bf16.mxu0 0
    %549 = vmatmul.mubr.bf16.gmra.mrb[0].mxu0 %v394
    %v550 = vpop.f32.mrb[0].mxu0
    %v551 = vadd.f32 %v334, %v550
    %v552 = vpop.f32.mrb[0].mxu0
    %v553 = vpop.f32.mrb[0].mxu0
    %v554 = vadd.f32 %v334, %v553
    %v555 = vpop.f32.mrb[0].mxu0
    %556 = vdwg.mxu0
    %v557 = vmax.f32 %v431, 0.0
    %v558 = vmax.f32 %v434, 0.0
    %v559 = vmax.f32 %v439, 0.0
    %v560 = vmax.f32 %v442, 0.0
    %v561 = vmax.f32 %v447, 0.0
    %v562 = vmax.f32 %v450, 0.0
    %v563 = vmax.f32 %v455, 0.0
    %v564 = vmax.f32 %v458, 0.0
    %v565 = vmax.f32 %v463, 0.0
    %v566 = vmax.f32 %v466, 0.0
    %v567 = vmax.f32 %v471, 0.0
    %v568 = vmax.f32 %v474, 0.0
    %v569 = vmax.f32 %v479, 0.0
    %v570 = vmax.f32 %v482, 0.0
    %v571 = vmax.f32 %v487, 0.0
    %v572 = vmax.f32 %v490, 0.0
    %v573 = vmax.f32 %v495, 0.0
    %v574 = vmax.f32 %v498, 0.0
    %v575 = vmax.f32 %v503, 0.0
    %v576 = vmax.f32 %v506, 0.0
    %v577 = vmax.f32 %v511, 0.0
    %v578 = vmax.f32 %v514, 0.0
    %v579 = vmax.f32 %v519, 0.0
    %v580 = vmax.f32 %v522, 0.0
    %v581 = vmax.f32 %v527, 0.0
    %v582 = vmax.f32 %v530, 0.0
    %v583 = vmax.f32 %v535, 0.0
    %v584 = vmax.f32 %v538, 0.0
    %v585 = vmax.f32 %v543, 0.0
    %v586 = vmax.f32 %v546, 0.0
    %v587 = vmax.f32 %v551, 0.0
    %v588 = vmax.f32 %v554, 0.0
    %v589 = vpack.c.bf16 %v558, %v557
    %v590 = vpack.c.bf16 %v560, %v559
    %v591 = vpack.c.bf16 %v562, %v561
    %v592 = vpack.c.bf16 %v564, %v563
    %v593 = vpack.c.bf16 %v566, %v565
    %v594 = vpack.c.bf16 %v568, %v567
    %v595 = vpack.c.bf16 %v570, %v569
    %v596 = vpack.c.bf16 %v572, %v571
    %v597 = vpack.c.bf16 %v574, %v573
    %v598 = vpack.c.bf16 %v576, %v575
    %v599 = vpack.c.bf16 %v578, %v577
    %v600 = vpack.c.bf16 %v580, %v579
    %v601 = vpack.c.bf16 %v582, %v581
    %v602 = vpack.c.bf16 %v584, %v583
    %v603 = vpack.c.bf16 %v586, %v585
    %v604 = vpack.c.bf16 %v588, %v587
    %v605 = vld [vmem:[%s5] sm:$0xf]
    %v606 = vld [vmem:[%s5 + $0x4] sm:$0xf]
    %v607 = vld [vmem:[%s5 + $0x8] sm:$0xf]
    %v608 = vld [vmem:[%s5 + $0xc] sm:$0xf]
    %v609 = vld [vmem:[%s6] sm:$0x1]
    %v611 = vlaneseq
    %v612 = vshrl.u32 %v611, 7
    %v613 = vsub.s32 0, %v612
    %v614 = vrot.slane %v609, %v613
    %v620 = vunpack.c.l.b16 %v605
    %v621 = vunpack.c.l.b16 %v606
    %v622 = vunpack.c.l.b16 %v607
    %v623 = vunpack.c.l.b16 %v608
    %v624 = vpack.c.b16 %v621, %v620
    %v625 = vpack.c.b16 %v623, %v622
    %v629 = vsel %vm99, %v589, 0
    %v632 = vsel %vm99, %v590, 0
    %v635 = vsel %vm99, %v591, 0
    %v638 = vsel %vm99, %v592, 0
    %v641 = vsel %vm99, %v593, 0
    %v644 = vsel %vm99, %v594, 0
    %v647 = vsel %vm99, %v595, 0
    %v650 = vsel %vm99, %v596, 0
    %v653 = vsel %vm99, %v597, 0
    %v656 = vsel %vm99, %v598, 0
    %v659 = vsel %vm99, %v599, 0
    %v662 = vsel %vm99, %v600, 0
    %v665 = vsel %vm99, %v601, 0
    %v668 = vsel %vm99, %v602, 0
    %v671 = vsel %vm99, %v603, 0
    %v674 = vsel %vm99, %v604, 0
    %676 = vmatprep.subr.bf16.mxu0 0
    %677 = vmatpush1.bf16.msra.mxu0 %v624
    %678 = vmatprep.subr.bf16.mxu0 0
    %679 = vmatpush1.bf16.msra.mxu0 %v625
    %680 = vmatprep.subr.bf16.mxu0 0
    %681 = vmatpush1.bf16.msra.mxu0 0
    %682 = vmatprep.subr.bf16.mxu0 0
    %683 = vmatpush1.bf16.msra.mxu0 0
    %684 = vmatprep.subr.bf16.mxu0 0
    %685 = vmatpush1.bf16.msra.mxu0 0
    %686 = vmatprep.subr.bf16.mxu0 0
    %687 = vmatpush1.bf16.msra.mxu0 0
    %688 = vmatprep.subr.bf16.mxu0 0
    %689 = vmatpush1.bf16.msra.mxu0 0
    %690 = vmatprep.subr.bf16.mxu0 0
    %691 = vmatpush1.bf16.msra.mxu0 0
    %692 = vmatprep.subr.bf16.mxu0 0
    %693 = vmatpush1.bf16.msra.mxu0 0
    %694 = vmatprep.subr.bf16.mxu0 0
    %695 = vmatpush1.bf16.msra.mxu0 0
    %696 = vmatprep.subr.bf16.mxu0 0
    %697 = vmatpush1.bf16.msra.mxu0 0
    %698 = vmatprep.subr.bf16.mxu0 0
    %699 = vmatpush1.bf16.msra.mxu0 0
    %700 = vmatprep.subr.bf16.mxu0 0
    %701 = vmatpush1.bf16.msra.mxu0 0
    %702 = vmatprep.subr.bf16.mxu0 0
    %703 = vmatpush1.bf16.msra.mxu0 0
    %704 = vmatprep.subr.bf16.mxu0 0
    %705 = vmatpush1.bf16.msra.mxu0 0
    %706 = vmatprep.subr.bf16.mxu0 0
    %707 = vmatpush1.bf16.msra.mxu0 0
    %708 = vmatprep.mubr.bf16.mxu0 0
    %709 = vmatmul.mubr.bf16.gmra.mrb[0].mxu0 %v629
    %v710 = vpop.f32.mrb[0].mxu0
    %v711 = vadd.f32 %v614, %v710
    %v712 = vpop.f32.mrb[0].mxu0
    %v713 = vpop.f32.mrb[0].mxu0
    %v714 = vadd.f32 %v614, %v713
    %v715 = vpop.f32.mrb[0].mxu0
    %716 = vmatprep.mubr.bf16.mxu0 0
    %717 = vmatmul.mubr.bf16.gmra.mrb[0].mxu0 %v632
    %v718 = vpop.f32.mrb[0].mxu0
    %v719 = vadd.f32 %v614, %v718
    %v720 = vpop.f32.mrb[0].mxu0
    %v721 = vpop.f32.mrb[0].mxu0
    %v722 = vadd.f32 %v614, %v721
    %v723 = vpop.f32.mrb[0].mxu0
    %724 = vmatprep.mubr.bf16.mxu0 0
    %725 = vmatmul.mubr.bf16.gmra.mrb[0].mxu0 %v635
    %v726 = vpop.f32.mrb[0].mxu0
    %v727 = vadd.f32 %v614, %v726
    %v728 = vpop.f32.mrb[0].mxu0
    %v729 = vpop.f32.mrb[0].mxu0
    %v730 = vadd.f32 %v614, %v729
    %v731 = vpop.f32.mrb[0].mxu0
    %732 = vmatprep.mubr.bf16.mxu0 0
    %733 = vmatmul.mubr.bf16.gmra.mrb[0].mxu0 %v638
    %v734 = vpop.f32.mrb[0].mxu0
    %v735 = vadd.f32 %v614, %v734
    %v736 = vpop.f32.mrb[0].mxu0
    %v737 = vpop.f32.mrb[0].mxu0
    %v738 = vadd.f32 %v614, %v737
    %v739 = vpop.f32.mrb[0].mxu0
    %740 = vmatprep.mubr.bf16.mxu0 0
    %741 = vmatmul.mubr.bf16.gmra.mrb[0].mxu0 %v641
    %v742 = vpop.f32.mrb[0].mxu0
    %v743 = vadd.f32 %v614, %v742
    %v744 = vpop.f32.mrb[0].mxu0
    %v745 = vpop.f32.mrb[0].mxu0
    %v746 = vadd.f32 %v614, %v745
    %v747 = vpop.f32.mrb[0].mxu0
    %748 = vmatprep.mubr.bf16.mxu0 0
    %749 = vmatmul.mubr.bf16.gmra.mrb[0].mxu0 %v644
    %v750 = vpop.f32.mrb[0].mxu0
    %v751 = vadd.f32 %v614, %v750
    %v752 = vpop.f32.mrb[0].mxu0
    %v753 = vpop.f32.mrb[0].mxu0
    %v754 = vadd.f32 %v614, %v753
    %v755 = vpop.f32.mrb[0].mxu0
    %756 = vmatprep.mubr.bf16.mxu0 0
    %757 = vmatmul.mubr.bf16.gmra.mrb[0].mxu0 %v647
    %v758 = vpop.f32.mrb[0].mxu0
    %v759 = vadd.f32 %v614, %v758
    %v760 = vpop.f32.mrb[0].mxu0
    %v761 = vpop.f32.mrb[0].mxu0
    %v762 = vadd.f32 %v614, %v761
    %v763 = vpop.f32.mrb[0].mxu0
    %764 = vmatprep.mubr.bf16.mxu0 0
    %765 = vmatmul.mubr.bf16.gmra.mrb[0].mxu0 %v650
    %v766 = vpop.f32.mrb[0].mxu0
    %v767 = vadd.f32 %v614, %v766
    %v768 = vpop.f32.mrb[0].mxu0
    %v769 = vpop.f32.mrb[0].mxu0
    %v770 = vadd.f32 %v614, %v769
    %v771 = vpop.f32.mrb[0].mxu0
    %772 = vmatprep.mubr.bf16.mxu0 0
    %773 = vmatmul.mubr.bf16.gmra.mrb[0].mxu0 %v653
    %v774 = vpop.f32.mrb[0].mxu0
    %v775 = vadd.f32 %v614, %v774
    %v776 = vpop.f32.mrb[0].mxu0
    %v777 = vpop.f32.mrb[0].mxu0
    %v778 = vadd.f32 %v614, %v777
    %v779 = vpop.f32.mrb[0].mxu0
    %780 = vmatprep.mubr.bf16.mxu0 0
    %781 = vmatmul.mubr.bf16.gmra.mrb[0].mxu0 %v656
    %v782 = vpop.f32.mrb[0].mxu0
    %v783 = vadd.f32 %v614, %v782
    %v784 = vpop.f32.mrb[0].mxu0
    %v785 = vpop.f32.mrb[0].mxu0
    %v786 = vadd.f32 %v614, %v785
    %v787 = vpop.f32.mrb[0].mxu0
    %788 = vmatprep.mubr.bf16.mxu0 0
    %789 = vmatmul.mubr.bf16.gmra.mrb[0].mxu0 %v659
    %v790 = vpop.f32.mrb[0].mxu0
    %v791 = vadd.f32 %v614, %v790
    %v792 = vpop.f32.mrb[0].mxu0
    %v793 = vpop.f32.mrb[0].mxu0
    %v794 = vadd.f32 %v614, %v793
    %v795 = vpop.f32.mrb[0].mxu0
    %796 = vmatprep.mubr.bf16.mxu0 0
    %797 = vmatmul.mubr.bf16.gmra.mrb[0].mxu0 %v662
    %v798 = vpop.f32.mrb[0].mxu0
    %v799 = vadd.f32 %v614, %v798
    %v800 = vpop.f32.mrb[0].mxu0
    %v801 = vpop.f32.mrb[0].mxu0
    %v802 = vadd.f32 %v614, %v801
    %v803 = vpop.f32.mrb[0].mxu0
    %804 = vmatprep.mubr.bf16.mxu0 0
    %805 = vmatmul.mubr.bf16.gmra.mrb[0].mxu0 %v665
    %v806 = vpop.f32.mrb[0].mxu0
    %v807 = vadd.f32 %v614, %v806
    %v808 = vpop.f32.mrb[0].mxu0
    %v809 = vpop.f32.mrb[0].mxu0
    %v810 = vadd.f32 %v614, %v809
    %v811 = vpop.f32.mrb[0].mxu0
    %812 = vmatprep.mubr.bf16.mxu0 0
    %813 = vmatmul.mubr.bf16.gmra.mrb[0].mxu0 %v668
    %v814 = vpop.f32.mrb[0].mxu0
    %v815 = vadd.f32 %v614, %v814
    %v816 = vpop.f32.mrb[0].mxu0
    %v817 = vpop.f32.mrb[0].mxu0
    %v818 = vadd.f32 %v614, %v817
    %v819 = vpop.f32.mrb[0].mxu0
    %820 = vmatprep.mubr.bf16.mxu0 0
    %821 = vmatmul.mubr.bf16.gmra.mrb[0].mxu0 %v671
    %v822 = vpop.f32.mrb[0].mxu0
    %v823 = vadd.f32 %v614, %v822
    %v824 = vpop.f32.mrb[0].mxu0
    %v825 = vpop.f32.mrb[0].mxu0
    %v826 = vadd.f32 %v614, %v825
    %v827 = vpop.f32.mrb[0].mxu0
    %828 = vmatprep.mubr.bf16.mxu0 0
    %829 = vmatmul.mubr.bf16.gmra.mrb[0].mxu0 %v674
    %v830 = vpop.f32.mrb[0].mxu0
    %v831 = vadd.f32 %v614, %v830
    %v832 = vpop.f32.mrb[0].mxu0
    %v833 = vpop.f32.mrb[0].mxu0
    %v834 = vadd.f32 %v614, %v833
    %v835 = vpop.f32.mrb[0].mxu0
    %836 = vdwg.mxu0
    %v837 = vpack.c.bf16 %v714, %v711
    %v838 = vpack.c.bf16 %v722, %v719
    %v839 = vpack.c.bf16 %v730, %v727
    %v840 = vpack.c.bf16 %v738, %v735
    %v841 = vpack.c.bf16 %v746, %v743
    %v842 = vpack.c.bf16 %v754, %v751
    %v843 = vpack.c.bf16 %v762, %v759
    %v844 = vpack.c.bf16 %v770, %v767
    %v845 = vpack.c.bf16 %v778, %v775
    %v846 = vpack.c.bf16 %v786, %v783
    %v847 = vpack.c.bf16 %v794, %v791
    %v848 = vpack.c.bf16 %v802, %v799
    %v849 = vpack.c.bf16 %v810, %v807
    %v850 = vpack.c.bf16 %v818, %v815
    %v851 = vpack.c.bf16 %v826, %v823
    %v852 = vpack.c.bf16 %v834, %v831
    %v869 = vunpack.c.l.b16 %v837
    %v870 = vunpack.c.h.b16 %v837
    %v871 = vunpack.c.l.b16 %v838
    %v872 = vunpack.c.h.b16 %v838
    %v873 = vunpack.c.l.b16 %v839
    %v874 = vunpack.c.h.b16 %v839
    %v875 = vunpack.c.l.b16 %v840
    %v876 = vunpack.c.h.b16 %v840
    %v877 = vunpack.c.l.b16 %v841
    %v878 = vunpack.c.h.b16 %v841
    %v879 = vunpack.c.l.b16 %v842
    %v880 = vunpack.c.h.b16 %v842
    %v881 = vunpack.c.l.b16 %v843
    %v882 = vunpack.c.h.b16 %v843
    %v883 = vunpack.c.l.b16 %v844
    %v884 = vunpack.c.h.b16 %v844
    %v885 = vunpack.c.l.b16 %v845
    %v886 = vunpack.c.h.b16 %v845
    %v887 = vunpack.c.l.b16 %v846
    %v888 = vunpack.c.h.b16 %v846
    %v889 = vunpack.c.l.b16 %v847
    %v890 = vunpack.c.h.b16 %v847
    %v891 = vunpack.c.l.b16 %v848
    %v892 = vunpack.c.h.b16 %v848
    %v893 = vunpack.c.l.b16 %v849
    %v894 = vunpack.c.h.b16 %v849
    %v895 = vunpack.c.l.b16 %v850
    %v896 = vunpack.c.h.b16 %v850
    %v897 = vunpack.c.l.b16 %v851
    %v898 = vunpack.c.h.b16 %v851
    %v899 = vunpack.c.l.b16 %v852
    %v900 = vunpack.c.h.b16 %v852
    %v901 = vpack.c.b16 %v869, %v869
    %v902 = vpack.c.b16 %v870, %v870
    %v903 = vpack.c.b16 %v871, %v871
    %v904 = vpack.c.b16 %v872, %v872
    %v905 = vpack.c.b16 %v873, %v873
    %v906 = vpack.c.b16 %v874, %v874
    %v907 = vpack.c.b16 %v875, %v875
    %v908 = vpack.c.b16 %v876, %v876
    %v909 = vpack.c.b16 %v877, %v877
    %v910 = vpack.c.b16 %v878, %v878
    %v911 = vpack.c.b16 %v879, %v879
    %v912 = vpack.c.b16 %v880, %v880
    %v913 = vpack.c.b16 %v881, %v881
    %v914 = vpack.c.b16 %v882, %v882
    %v915 = vpack.c.b16 %v883, %v883
    %v916 = vpack.c.b16 %v884, %v884
    %v917 = vpack.c.b16 %v885, %v885
    %v918 = vpack.c.b16 %v886, %v886
    %v919 = vpack.c.b16 %v887, %v887
    %v920 = vpack.c.b16 %v888, %v888
    %v921 = vpack.c.b16 %v889, %v889
    %v922 = vpack.c.b16 %v890, %v890
    %v923 = vpack.c.b16 %v891, %v891
    %v924 = vpack.c.b16 %v892, %v892
    %v925 = vpack.c.b16 %v893, %v893
    %v926 = vpack.c.b16 %v894, %v894
    %v927 = vpack.c.b16 %v895, %v895
    %v928 = vpack.c.b16 %v896, %v896
    %v929 = vpack.c.b16 %v897, %v897
    %v930 = vpack.c.b16 %v898, %v898
    %v931 = vpack.c.b16 %v899, %v899
    %v932 = vpack.c.b16 %v900, %v900
    %965 = vst [vmem:[#allocation2] sm:$0xf] %v901
    %966 = vst [vmem:[#allocation2 + $0x4] sm:$0xf] %v902
    %967 = vst [vmem:[#allocation2 + $0x8] sm:$0xf] %v903
    %968 = vst [vmem:[#allocation2 + $0xc] sm:$0xf] %v904
    %969 = vst [vmem:[#allocation2 + $0x10] sm:$0xf] %v905
    %970 = vst [vmem:[#allocation2 + $0x14] sm:$0xf] %v906
    %971 = vst [vmem:[#allocation2 + $0x18] sm:$0xf] %v907
    %972 = vst [vmem:[#allocation2 + $0x1c] sm:$0xf] %v908
    %973 = vst [vmem:[#allocation2 + $0x20] sm:$0xf] %v909
    %974 = vst [vmem:[#allocation2 + $0x24] sm:$0xf] %v910
    %975 = vst [vmem:[#allocation2 + $0x28] sm:$0xf] %v911
    %976 = vst [vmem:[#allocation2 + $0x2c] sm:$0xf] %v912
    %977 = vst [vmem:[#allocation2 + $0x30] sm:$0xf] %v913
    %978 = vst [vmem:[#allocation2 + $0x34] sm:$0xf] %v914
    %979 = vst [vmem:[#allocation2 + $0x38] sm:$0xf] %v915
    %980 = vst [vmem:[#allocation2 + $0x3c] sm:$0xf] %v916
    %981 = vst [vmem:[#allocation2 + $0x40] sm:$0xf] %v917
    %982 = vst [vmem:[#allocation2 + $0x44] sm:$0xf] %v918
    %983 = vst [vmem:[#allocation2 + $0x48] sm:$0xf] %v919
    %984 = vst [vmem:[#allocation2 + $0x4c] sm:$0xf] %v920
    %985 = vst [vmem:[#allocation2 + $0x50] sm:$0xf] %v921
    %986 = vst [vmem:[#allocation2 + $0x54] sm:$0xf] %v922
    %987 = vst [vmem:[#allocation2 + $0x58] sm:$0xf] %v923
    %988 = vst [vmem:[#allocation2 + $0x5c] sm:$0xf] %v924
    %989 = vst [vmem:[#allocation2 + $0x60] sm:$0xf] %v925
    %990 = vst [vmem:[#allocation2 + $0x64] sm:$0xf] %v926
    %991 = vst [vmem:[#allocation2 + $0x68] sm:$0xf] %v927
    %992 = vst [vmem:[#allocation2 + $0x6c] sm:$0xf] %v928
    %993 = vst [vmem:[#allocation2 + $0x70] sm:$0xf] %v929
    %994 = vst [vmem:[#allocation2 + $0x74] sm:$0xf] %v930
    %995 = vst [vmem:[#allocation2 + $0x78] sm:$0xf] %v931
    %996 = vst [vmem:[#allocation2 + $0x7c] sm:$0xf] %v932
    // Predicated region
    $region30: #{tpu_custom_call.1} parent=1 // pred_check
      _
    $region31: #{tpu_custom_call.1} parent=1 // pred_check_branch
      %998 = sbr.rel (0) target = $region33
    $region32: #{tpu_custom_call.1} parent=1 // pred_region
      %s1000 = ssub.s32 2048, 2048
      %1001 = vsyncadd [#allocation3], %s1000
      %s1002 = sshll.u32 [#allocation2], 4
      %s1003 = int_to_ptr.vmem [resolvable:$true] %s1002
      %1008 = dma.vmem_to_hbm [thread:$0]  %s1003, 2048, %s7, [#allocation3], 64, 64, 4
    $region33: #{tpu_custom_call.1} parent=1 // pred_fallthru
      _
    // Predicated region
    $region34: #{tpu_custom_call.1} parent=1 // pred_check
      _
    $region35: #{tpu_custom_call.1} parent=1 // pred_check_branch
      %1010 = sbr.rel (0) target = $region37
    $region36: #{tpu_custom_call.1} parent=1 // pred_region
      %1011 = dma.done [#allocation3], 2048
    $region37: #{tpu_custom_call.1} parent=1 // pred_fallthru
      _
    %1012 = vsyncpa [#allocation3], 1

</llo_original>
